<compile_context>
chip_gen: v5e
topology: v5e:2x2
jax: 0.10.0
libtpu: 0.0.40
codegen_flags: <defaults>
</compile_context>

<pallas_src>
import functools

import jax
import jax.numpy as jnp
from jax.experimental import pallas as pl
from jax.experimental.pallas import tpu as pltpu

SUBLANE = 8


def _round_up(n, m):
    return ((n + m - 1) // m) * m


def fixed_point_quantize(x, int_bits, frac_bits):
    """Round-to-nearest fixed-point quantization with saturation.

    IB integer bits (incl. sign), FB fractional bits: grid of 2^-FB,
    clamp to [-2^(IB-1), 2^(IB-1) - 2^-FB].
    Note: jnp.round is round-half-to-even; if the PyTorch Fixed_Point_Quantize
    uses half-away-from-zero, results may differ exactly at *.5 ties.
    """
    scale = 2.0 ** frac_bits
    qmax = 2.0 ** (int_bits - 1) - 1.0 / scale
    qmin = -(2.0 ** (int_bits - 1))
    return jnp.clip(jnp.round(x * scale) / scale, qmin, qmax)


def _qmlp_kernel(n_layers, feature_bits, x_ref, *refs):
    """refs = (w0_ref, ..., w{n-1}_ref, o_ref).

    x_ref: (block_b, d_in) f32 batch tile (no lane padding).
    w_ref: (in, out) bf16, whole (tiny) weight resident in VMEM.
    o_ref: (block_b, n_out) f32 output tile (no lane padding).
    """
    w_refs = refs[:n_layers]
    o_ref = refs[n_layers]

    fb_int, fb_frac = feature_bits
    h = x_ref[...]
    for i in range(n_layers):
        # quantize features before every linear layer
        h = fixed_point_quantize(h, fb_int, fb_frac)
        w = w_refs[i][...]  # bf16; exact for (3,5) weights, no upcast needed
        # Exact hi/lo bf16 split of the (3,13)-quantized activations:
        # h = n * 2^-frac with <=16 significant bits; hi keeps the top 8,
        # lo the remaining <=8, both exact in bf16.  Two native bf16 MXU
        # passes then give f32-matmul accuracy without f32 MXU emulation.
        h_hi = h.astype(jnp.bfloat16)
        h_lo = (h - h_hi.astype(jnp.float32)).astype(jnp.bfloat16)
        h = (jnp.dot(h_hi, w, preferred_element_type=jnp.float32)
             + jnp.dot(h_lo, w, preferred_element_type=jnp.float32))
        if i < n_layers - 1:
            h = jnp.maximum(h, 0.0)
    # final feature quantization; output block is (block_b, n_out) full-dim
    o_ref[...] = fixed_point_quantize(h, fb_int, fb_frac).astype(o_ref.dtype)


def qmlp_forward(x, weights_t, feature_bits=(3, 13), block_b=None):
    """x: (B, n_input_dims) f32; weights_t: list of (in, out) f32 matrices
    (already weight-quantized, i.e. torch Linear weights transposed)."""
    x = x.astype(jnp.float32)
    B, d_in = x.shape
    n_layers = len(weights_t)
    n_out = weights_t[-1].shape[1]
    assert weights_t[0].shape[0] == d_in

    # bf16 storage is exact for (3,5) fixed-point weights (<=8 significant
    # bits) and is fed directly to the MXU -> no per-step cast in the kernel.
    w_bf16 = [w.astype(jnp.bfloat16) for w in weights_t]

    # 512-1024-row tiles approach the HBM streaming roofline; ensure >=2 grid
    # steps whenever the batch can be split so both v7x TensorCores get work
    # (v5e/v6e are unaffected).  block_b stays a multiple of 8 sublanes.
    if block_b is None:
        block_b = min(1024, max(SUBLANE, _round_up(pl.cdiv(B, 2), SUBLANE)))
    block_b = max(SUBLANE, _round_up(block_b, SUBLANE))
    grid_b = pl.cdiv(B, block_b)  # ragged tail handled by clipped edge DMA

    kernel = functools.partial(_qmlp_kernel, n_layers, tuple(feature_bits))

    in_specs = [pl.BlockSpec((block_b, d_in), lambda b: (b, 0))]
    for w in w_bf16:
        # constant index_map -> weight block fetched once, reused every step
        in_specs.append(pl.BlockSpec(w.shape, lambda b: (0, 0)))

    return pl.pallas_call(
        kernel,
        out_shape=jax.ShapeDtypeStruct((B, n_out), jnp.float32),
        grid_spec=pltpu.PrefetchScalarGridSpec(
            num_scalar_prefetch=0,
            grid=(grid_b,),
            in_specs=in_specs,
            out_specs=pl.BlockSpec((block_b, n_out), lambda b: (b, 0)),
        ),
        compiler_params=pltpu.CompilerParams(
            dimension_semantics=("parallel",)),
    )(x, *w_bf16)


def init_qmlp_params(key, n_input_dims, n_output_dims, n_neurons,
                     n_hidden_layers, weight_bits=(3, 5)):
    """Deterministic weight init (uniform +/- 1/sqrt(fan_in), like torch Linear),
    then quantized with WeightBits as QMLP.load_states would do.
    Returned transposed to (in, out) for the kernel layout, unpadded f32."""
    dims = ([(n_neurons, n_input_dims)]
            + [(n_neurons, n_neurons) for _ in range(n_hidden_layers - 1)]
            + [(n_output_dims, n_neurons)])
    weights_t = []
    for shape in dims:
        key, sub = jax.random.split(key)
        fan_in = shape[1]
        bound = 1.0 / jnp.sqrt(jnp.float32(fan_in))
        w = jax.random.uniform(sub, shape, jnp.float32, -bound, bound)
        w = fixed_point_quantize(w, weight_bits[0], weight_bits[1])
        weights_t.append(jnp.transpose(w))  # (in, out)
    return weights_t


def qmlp_reference(x, weights_t, feature_bits=(3, 13)):
    """Pure-JAX reference of QMLP.forward for correctness checks.

    Uses Precision.HIGHEST so the reference matmul is ~f32-accurate, matching
    the kernel's exact hi/lo bf16-split path (default-precision h @ w would
    silently truncate the (3,13) activations to bf16)."""
    fb_int, fb_frac = feature_bits
    h = x.astype(jnp.float32)
    for i, w in enumerate(weights_t):
        h = fixed_point_quantize(h, fb_int, fb_frac)
        h = jnp.dot(h, w, precision=jax.lax.Precision.HIGHEST)
        if i < len(weights_t) - 1:
            h = jnp.maximum(h, 0.0)
    return fixed_point_quantize(h, fb_int, fb_frac)


if __name__ == "__main__":
    # Config consistent with QMLP defaults: n_neurons=64, n_hidden_layers=1.
    n_input_dims, n_output_dims = 32, 16
    n_neurons, n_hidden_layers = 64, 1

    key = jax.random.PRNGKey(0)
    kx, kw, kx2, kx3 = jax.random.split(key, 4)
    weights_t = init_qmlp_params(kw, n_input_dims, n_output_dims,
                                 n_neurons, n_hidden_layers,
                                 weight_bits=(3, 5))

    # Tolerance: kernel and reference are both ~f32-accurate; residual
    # differences come from accumulation order and occasional one-LSB (2^-13)
    # rounding ties in the fixed-point grid, which may cascade through the
    # hidden layer -> allow a couple of output LSBs.
    TOL = 2e-3

    # 1) small batch, single grid step
    x = jax.random.normal(kx, (8, n_input_dims), dtype=jnp.float32)
    out = jax.block_until_ready(qmlp_forward(x, weights_t, feature_bits=(3, 13)))
    ref = qmlp_reference(x, weights_t, feature_bits=(3, 13))
    assert out.shape == (8, n_output_dims)
    assert jnp.allclose(out, ref, atol=TOL), "mismatch vs reference (batch=8)"

    # 2) multi-step "parallel" grid (pipelined; both TensorCores on v7x)
    x2 = jax.random.normal(kx2, (512, n_input_dims), dtype=jnp.float32)
    out2 = jax.block_until_ready(qmlp_forward(x2, weights_t))
    assert jnp.allclose(out2, qmlp_reference(x2, weights_t), atol=TOL), \
        "mismatch vs reference (batch=512)"

    # 3) ragged batch: grid = cdiv(B, block_b), clipped edge block,
    #    no wrapper-side pad/slice copies.
    x3 = jax.random.normal(kx3, (300, n_input_dims), dtype=jnp.float32)
    out3 = jax.block_until_ready(qmlp_forward(x3, weights_t, block_b=256))
    assert out3.shape == (300, n_output_dims)
    assert jnp.allclose(out3, qmlp_reference(x3, weights_t), atol=TOL), \
        "mismatch vs reference (batch=300)"

    print("KERNEL_OK")
</pallas_src>

<mosaic_0001>
module attributes {stable_mosaic.version = 11 : i64} {
  func.func @_qmlp_kernel(%arg0: i32, %arg1: memref<8x32xf32, #tpu.memory_space<vmem>>, %arg2: memref<32x64xbf16, #tpu.memory_space<vmem>>, %arg3: memref<64x16xbf16, #tpu.memory_space<vmem>>, %arg4: memref<8x16xf32, #tpu.memory_space<vmem>>) attributes {dimension_semantics = [#tpu.dimension_semantics<parallel>], iteration_bounds = array<i64: 1>, scalar_prefetch = 0 : i64, scratch_operands = 0 : i64, tpu.core_type = #tpu.core_type<tc>, window_params = [{transform_indices = @transform_0, window_bounds = array<i64: 8, 32>}, {pipeline_mode = #tpu.pipeline_mode<synchronous>, transform_indices = @transform_1, window_bounds = array<i64: 32, 64>}, {pipeline_mode = #tpu.pipeline_mode<synchronous>, transform_indices = @transform_2, window_bounds = array<i64: 64, 16>}, {transform_indices = @transform_3, window_bounds = array<i64: 8, 16>}]} {
    %c0 = arith.constant 0 : index
    %c0_0 = arith.constant 0 : index
    %0 = vector.load %arg1[%c0, %c0_0] : memref<8x32xf32, #tpu.memory_space<vmem>>, vector<8x32xf32>
    %cst = arith.constant 8.192000e+03 : f32
    %1 = vector.broadcast %cst : f32 to vector<8x32xf32>
    %2 = arith.mulf %0, %1 : vector<8x32xf32>
    %3 = math.roundeven %2 : vector<8x32xf32>
    %cst_1 = arith.constant 8.192000e+03 : f32
    %4 = vector.broadcast %cst_1 : f32 to vector<8x32xf32>
    %5 = arith.divf %3, %4 : vector<8x32xf32>
    %cst_2 = arith.constant -4.000000e+00 : f32
    %cst_3 = arith.constant 3.99987793 : f32
    %6 = vector.broadcast %cst_2 : f32 to vector<8x32xf32>
    %7 = arith.maximumf %6, %5 : vector<8x32xf32>
    %8 = vector.broadcast %cst_3 : f32 to vector<8x32xf32>
    %9 = arith.minimumf %8, %7 : vector<8x32xf32>
    %c0_4 = arith.constant 0 : index
    %c0_5 = arith.constant 0 : index
    %10 = vector.load %arg2[%c0_4, %c0_5] : memref<32x64xbf16, #tpu.memory_space<vmem>>, vector<32x64xbf16>
    %11 = arith.truncf %9 : vector<8x32xf32> to vector<8x32xbf16>
    %12 = arith.extf %11 : vector<8x32xbf16> to vector<8x32xf32>
    %13 = arith.subf %9, %12 : vector<8x32xf32>
    %14 = arith.truncf %13 : vector<8x32xf32> to vector<8x32xbf16>
    %cst_6 = arith.constant dense<0.000000e+00> : vector<8x64xf32>
    %15 = tpu.matmul %11, %10, %cst_6 {dimension_numbers = #tpu.dot_dimension_numbers<[1], [0], [0], [1], [0, 0, 1, 1], [], []>} : vector<8x32xbf16>, vector<32x64xbf16>, vector<8x64xf32> -> vector<8x64xf32>
    %cst_7 = arith.constant dense<0.000000e+00> : vector<8x64xf32>
    %16 = tpu.matmul %14, %10, %cst_7 {dimension_numbers = #tpu.dot_dimension_numbers<[1], [0], [0], [1], [0, 0, 1, 1], [], []>} : vector<8x32xbf16>, vector<32x64xbf16>, vector<8x64xf32> -> vector<8x64xf32>
    %17 = arith.addf %15, %16 : vector<8x64xf32>
    %cst_8 = arith.constant 0.000000e+00 : f32
    %18 = vector.broadcast %cst_8 : f32 to vector<8x64xf32>
    %19 = arith.maximumf %17, %18 : vector<8x64xf32>
    %cst_9 = arith.constant 8.192000e+03 : f32
    %20 = vector.broadcast %cst_9 : f32 to vector<8x64xf32>
    %21 = arith.mulf %19, %20 : vector<8x64xf32>
    %22 = math.roundeven %21 : vector<8x64xf32>
    %cst_10 = arith.constant 8.192000e+03 : f32
    %23 = vector.broadcast %cst_10 : f32 to vector<8x64xf32>
    %24 = arith.divf %22, %23 : vector<8x64xf32>
    %cst_11 = arith.constant -4.000000e+00 : f32
    %cst_12 = arith.constant 3.99987793 : f32
    %25 = vector.broadcast %cst_11 : f32 to vector<8x64xf32>
    %26 = arith.maximumf %25, %24 : vector<8x64xf32>
    %27 = vector.broadcast %cst_12 : f32 to vector<8x64xf32>
    %28 = arith.minimumf %27, %26 : vector<8x64xf32>
    %c0_13 = arith.constant 0 : index
    %c0_14 = arith.constant 0 : index
    %29 = vector.load %arg3[%c0_13, %c0_14] : memref<64x16xbf16, #tpu.memory_space<vmem>>, vector<64x16xbf16>
    %30 = arith.truncf %28 : vector<8x64xf32> to vector<8x64xbf16>
    %31 = arith.extf %30 : vector<8x64xbf16> to vector<8x64xf32>
    %32 = arith.subf %28, %31 : vector<8x64xf32>
    %33 = arith.truncf %32 : vector<8x64xf32> to vector<8x64xbf16>
    %cst_15 = arith.constant dense<0.000000e+00> : vector<8x16xf32>
    %34 = tpu.matmul %30, %29, %cst_15 {dimension_numbers = #tpu.dot_dimension_numbers<[1], [0], [0], [1], [0, 0, 1, 1], [], []>} : vector<8x64xbf16>, vector<64x16xbf16>, vector<8x16xf32> -> vector<8x16xf32>
    %cst_16 = arith.constant dense<0.000000e+00> : vector<8x16xf32>
    %35 = tpu.matmul %33, %29, %cst_16 {dimension_numbers = #tpu.dot_dimension_numbers<[1], [0], [0], [1], [0, 0, 1, 1], [], []>} : vector<8x64xbf16>, vector<64x16xbf16>, vector<8x16xf32> -> vector<8x16xf32>
    %36 = arith.addf %34, %35 : vector<8x16xf32>
    %cst_17 = arith.constant 8.192000e+03 : f32
    %37 = vector.broadcast %cst_17 : f32 to vector<8x16xf32>
    %38 = arith.mulf %36, %37 : vector<8x16xf32>
    %39 = math.roundeven %38 : vector<8x16xf32>
    %cst_18 = arith.constant 8.192000e+03 : f32
    %40 = vector.broadcast %cst_18 : f32 to vector<8x16xf32>
    %41 = arith.divf %39, %40 : vector<8x16xf32>
    %cst_19 = arith.constant -4.000000e+00 : f32
    %cst_20 = arith.constant 3.99987793 : f32
    %42 = vector.broadcast %cst_19 : f32 to vector<8x16xf32>
    %43 = arith.maximumf %42, %41 : vector<8x16xf32>
    %44 = vector.broadcast %cst_20 : f32 to vector<8x16xf32>
    %45 = arith.minimumf %44, %43 : vector<8x16xf32>
    %c0_21 = arith.constant 0 : index
    %c0_22 = arith.constant 0 : index
    %46 = vector.load %arg4[%c0_21, %c0_22] : memref<8x16xf32, #tpu.memory_space<vmem>>, vector<8x16xf32>
    tpu.vector_store %arg4[%c0_21, %c0_22], %45 {strides = array<i32>} : memref<8x16xf32, #tpu.memory_space<vmem>>, vector<8x16xf32>,
    return
  }
  func.func @transform_0(%arg0: i32) -> (i32, i32) {
    %c0_i32 = arith.constant 0 : i32
    %c0_i32_0 = arith.constant 0 : i32
    return %arg0, %c0_i32 : i32, i32
  }
  func.func @transform_1(%arg0: i32) -> (i32, i32) {
    %c0_i32 = arith.constant 0 : i32
    %c0_i32_0 = arith.constant 0 : i32
    %c0_i32_1 = arith.constant 0 : i32
    return %c0_i32, %c0_i32_0 : i32, i32
  }
  func.func @transform_2(%arg0: i32) -> (i32, i32) {
    %c0_i32 = arith.constant 0 : i32
    %c0_i32_0 = arith.constant 0 : i32
    %c0_i32_1 = arith.constant 0 : i32
    return %c0_i32, %c0_i32_0 : i32, i32
  }
  func.func @transform_3(%arg0: i32) -> (i32, i32) {
    %c0_i32 = arith.constant 0 : i32
    %c0_i32_0 = arith.constant 0 : i32
    return %arg0, %c0_i32 : i32, i32
  }
}

</mosaic_0001>

<llo_original>
// kernel: tpu_custom_call.1
$region0: #{tpu_custom_call.1}
  #allocation0 [shape = 'u32[]', space=smem, size = 0x4, offset = 0x4, fixed_abs, tag = 'smem constant byte address 0x4 - core index']
  #allocation1 [shape = 'u32[72,128]{1,0:T(1,128)}', space=vmem, size = 0x9000, scoped, tag = 'internal scratch']
  %s0 = inlined_call_operand.vmem [shape: f32[8,32], index: 0, kind: input, shape index: {}]
  %s1 = inlined_call_operand.vmem [shape: bf16[32,64], index: 1, kind: input, shape index: {}]
  %s2 = inlined_call_operand.vmem [shape: bf16[64,16], index: 2, kind: input, shape index: {}]
  %s3 = inlined_call_operand.hbm [shape: f32[8,16], index: 3, kind: output, shape index: {}]
  %s4 = sld [smem:[#allocation0]]
  $region22: #{tpu_custom_call.1} parent=0
    _
  %s6 = ssub.s32 1, %s4
  %s7 = scalar_select 0, %s6, %s4
  $region1: #{tpu_custom_call.1} parent=0
    #allocation2 [shape = 'u8[4096]{0}', space=vmem, size = 0x1000, scoped, tag = 'output window, operand 0, single buffered']
    #allocation3 [shape = 's32[1]{0}', space=sflag, size = 0x4, scoped, tag = 'scoped memory for tpu_custom_call.1']
    %8 = vsyncpa [#allocation3], 0
    // Predicated region
    $region2: #{tpu_custom_call.1} parent=1 // pred_check
      _
    $region3: #{tpu_custom_call.1} parent=1 // pred_check_branch
      %10 = sbr.rel (0) target = $region5
    $region4: #{tpu_custom_call.1} parent=1 // pred_region
      _
    $region5: #{tpu_custom_call.1} parent=1 // pred_fallthru
      _
    // Predicated region
    $region6: #{tpu_custom_call.1} parent=1 // pred_check
      _
    $region7: #{tpu_custom_call.1} parent=1 // pred_check_branch
      %12 = sbr.rel (0) target = $region9
    $region8: #{tpu_custom_call.1} parent=1 // pred_region
      _
    $region9: #{tpu_custom_call.1} parent=1 // pred_fallthru
      _
    // Predicated region
    $region10: #{tpu_custom_call.1} parent=1 // pred_check
      _
    $region11: #{tpu_custom_call.1} parent=1 // pred_check_branch
      %14 = sbr.rel (0) target = $region13
    $region12: #{tpu_custom_call.1} parent=1 // pred_region
      _
    $region13: #{tpu_custom_call.1} parent=1 // pred_fallthru
      _
    %v16 = vld [vmem:[%s0] sm:$0xff]
    %v17 = vmul.f32 %v16, 8192.0
    %v18 = vround.ne.pseudo %v17
    %v19 = vrcp.pop 8192.0
    %v20 = vmul.f32 8192.0, %v19
    %v21 = vsub.f32 1.0, %v20
    %v22 = vmul.f32 %v19, %v21
    %v23 = vadd.f32 %v19, %v22
    %vm24 = vweird.f32 %v19
    %v25 = vsel %vm24, %v19, %v23
    %v26 = vmul.f32 %v18, %v25
    %v27 = vmax.f32 %v26, -4.0
    %v28 = vmin.f32 %v27, 3.999878
    %v29 = vld [vmem:[%s1] sm:$0xf]
    %v30 = vld [vmem:[%s1 + $0x4] sm:$0xf]
    %v31 = vld [vmem:[%s1 + $0x8] sm:$0xf]
    %v32 = vld [vmem:[%s1 + $0xc] sm:$0xf]
    %v33 = vpack.c.bf16 %v28, %v28
    %v34 = vunpack.c.l.bf16 %v33
    %v35 = vsub.f32 %v28, %v34
    %v36 = vpack.c.bf16 %v35, %v35
    %v41 = vunpack.c.l.b16 %v29
    %v42 = vunpack.c.l.b16 %v30
    %v43 = vunpack.c.l.b16 %v31
    %v44 = vunpack.c.l.b16 %v32
    %v45 = vpack.c.b16 %v42, %v41
    %v46 = vpack.c.b16 %v44, %v43
    %vm49 = vcmask 261120
    %v51 = vsel %vm49, %v36, 0
    %53 = vmatpush.bf16.msra.mxu0 0
    %54 = vmatpush.bf16.msra.mxu0 0
    %55 = vmatpush.bf16.msra.mxu0 0
    %56 = vmatpush.bf16.msra.mxu0 0
    %57 = vmatpush.bf16.msra.mxu0 0
    %58 = vmatpush.bf16.msra.mxu0 0
    %59 = vmatpush.bf16.msra.mxu0 %v46
    %60 = vmatpush.bf16.msra.mxu0 %v45
    %61 = vmatmul.bf16.gmra.mxu0 %v51
    %v62 = vpop.f32.mrf.mxu0
    %v63 = vadd.f32 0.0, %v62
    %v64 = vpop.f32.mrf.mxu0
    %65 = vdwg.mxu0
    %v67 = vsel %vm49, %v33, 0
    %69 = vmatpush.bf16.msra.mxu0 0
    %70 = vmatpush.bf16.msra.mxu0 0
    %71 = vmatpush.bf16.msra.mxu0 0
    %72 = vmatpush.bf16.msra.mxu0 0
    %73 = vmatpush.bf16.msra.mxu0 0
    %74 = vmatpush.bf16.msra.mxu0 0
    %75 = vmatpush.bf16.msra.mxu0 %v46
    %76 = vmatpush.bf16.msra.mxu0 %v45
    %77 = vmatmul.bf16.gmra.mxu0 %v67
    %v78 = vpop.f32.mrf.mxu0
    %v79 = vadd.f32 %v63, %v78
    %v80 = vpop.f32.mrf.mxu0
    %81 = vdwg.mxu0
    %v82 = vmax.f32 %v79, 0.0
    %v83 = vmul.f32 %v82, 8192.0
    %v84 = vround.ne.pseudo %v83
    %v85 = vmul.f32 %v84, %v25
    %v86 = vmax.f32 %v85, -4.0
    %v87 = vmin.f32 %v86, 3.999878
    %v88 = vld [vmem:[%s2] sm:$0xf]
    %v89 = vld [vmem:[%s2 + $0x4] sm:$0xf]
    %v90 = vld [vmem:[%s2 + $0x8] sm:$0xf]
    %v91 = vld [vmem:[%s2 + $0xc] sm:$0xf]
    %v92 = vld [vmem:[%s2 + $0x10] sm:$0xf]
    %v93 = vld [vmem:[%s2 + $0x14] sm:$0xf]
    %v94 = vld [vmem:[%s2 + $0x18] sm:$0xf]
    %v95 = vld [vmem:[%s2 + $0x1c] sm:$0xf]
    %v96 = vpack.c.bf16 %v87, %v87
    %v97 = vunpack.c.l.bf16 %v96
    %v98 = vsub.f32 %v87, %v97
    %v99 = vpack.c.bf16 %v98, %v98
    %v108 = vunpack.c.l.b16 %v88
    %v109 = vunpack.c.l.b16 %v89
    %v110 = vunpack.c.l.b16 %v90
    %v111 = vunpack.c.l.b16 %v91
    %v112 = vunpack.c.l.b16 %v92
    %v113 = vunpack.c.l.b16 %v93
    %v114 = vunpack.c.l.b16 %v94
    %v115 = vunpack.c.l.b16 %v95
    %v116 = vpack.c.b16 %v109, %v108
    %v117 = vpack.c.b16 %v111, %v110
    %v118 = vpack.c.b16 %v113, %v112
    %v119 = vpack.c.b16 %v115, %v114
    %vm124 = vcmask 523264
    %v126 = vsel %vm124, %v99, 0
    %128 = vmatpush.bf16.msra.mxu0 0
    %129 = vmatpush.bf16.msra.mxu0 0
    %130 = vmatpush.bf16.msra.mxu0 0
    %131 = vmatpush.bf16.msra.mxu0 0
    %132 = vmatpush.bf16.msra.mxu0 %v119
    %133 = vmatpush.bf16.msra.mxu0 %v118
    %134 = vmatpush.bf16.msra.mxu0 %v117
    %135 = vmatpush.bf16.msra.mxu0 %v116
    %136 = vmatmul.bf16.gmra.mxu0 %v126
    %v137 = vpop.f32.mrf.mxu0
    %v138 = vadd.f32 0.0, %v137
    %v139 = vpop.f32.mrf.mxu0
    %140 = vdwg.mxu0
    %v142 = vsel %vm124, %v96, 0
    %144 = vmatpush.bf16.msra.mxu0 0
    %145 = vmatpush.bf16.msra.mxu0 0
    %146 = vmatpush.bf16.msra.mxu0 0
    %147 = vmatpush.bf16.msra.mxu0 0
    %148 = vmatpush.bf16.msra.mxu0 %v119
    %149 = vmatpush.bf16.msra.mxu0 %v118
    %150 = vmatpush.bf16.msra.mxu0 %v117
    %151 = vmatpush.bf16.msra.mxu0 %v116
    %152 = vmatmul.bf16.gmra.mxu0 %v142
    %v153 = vpop.f32.mrf.mxu0
    %v154 = vadd.f32 %v138, %v153
    %v155 = vpop.f32.mrf.mxu0
    %156 = vdwg.mxu0
    %v157 = vmul.f32 %v154, 8192.0
    %v158 = vround.ne.pseudo %v157
    %v159 = vmul.f32 %v158, %v25
    %v160 = vmax.f32 %v159, -4.0
    %v161 = vmin.f32 %v160, 3.999878
    %vm162 = vcmask 130048
    %163 = vst.msk [vmem:[#allocation2] sm:$0xff] %vm162, %v161
    // Predicated region
    $region14: #{tpu_custom_call.1} parent=1 // pred_check
      _
    $region15: #{tpu_custom_call.1} parent=1 // pred_check_branch
      %165 = sbr.rel (0) target = $region17
    $region16: #{tpu_custom_call.1} parent=1 // pred_region
      %167 = vsyncadd [#allocation3], 0
      %s169 = sshll.u32 [#allocation2], 4
      %s170 = int_to_ptr.vmem [resolvable:$true] %s169
      %s171 = sshll.u32 %s3, 4
      %s172 = int_to_ptr.hbm [resolvable:$true] %s171
      %174 = dma.vmem_to_hbm [thread:$0]  %s170, 128, %s172, [#allocation3]
    $region17: #{tpu_custom_call.1} parent=1 // pred_fallthru
      _
    // Predicated region
    $region18: #{tpu_custom_call.1} parent=1 // pred_check
      _
    $region19: #{tpu_custom_call.1} parent=1 // pred_check_branch
      %176 = sbr.rel (0) target = $region21
    $region20: #{tpu_custom_call.1} parent=1 // pred_region
      %178 = dma.done [#allocation3], 128
    $region21: #{tpu_custom_call.1} parent=1 // pred_fallthru
      _
    %179 = vsyncpa [#allocation3], 1

</llo_original>
